<compile_context>
chip_gen: v7x
topology: tpu7x:2x2x1
jax: 0.10.0
libtpu: 0.0.40
codegen_flags: <defaults>
</compile_context>

<pallas_src>
import jax
import jax.numpy as jnp
from jax.experimental import pallas as pl
from jax.experimental.pallas import tpu as pltpu  # noqa: F401  (TPU backend)


def _identity_copy_kernel(x_ref, o_ref):
    # split([1,1,1], dim=1) followed by cat(dim=1) is an exact identity:
    # a straight lane-dense copy of v1.
    o_ref[...] = x_ref[...]


def _identity_copy(x2d):
    """Single-launch, single-step identity copy with input/output aliasing."""
    spec = pl.BlockSpec(x2d.shape, lambda: (0,) * x2d.ndim)
    return pl.pallas_call(
        _identity_copy_kernel,
        out_shape=jax.ShapeDtypeStruct(x2d.shape, x2d.dtype),
        in_specs=[spec],
        out_specs=spec,
        input_output_aliases={0: 0},
    )(x2d)


def model_forward(v1, v2):
    """Mirrors Model.forward: (cat(split(v1)), split(v1), squeeze(v2))."""
    B, C, H, W = v1.shape
    assert C == 3, "torch.split(v1, [1,1,1], dim=1) requires 3 channels"

    total = B * C * H * W
    if total % 128 == 0:
        # Lane-dense slab: last dim exactly 128 -> unmasked vld/vst.
        v1_flat = jnp.reshape(v1, (total // 128, 128))
    else:
        # Fallback: full-array block (block_shape == array dims is always legal).
        v1_flat = jnp.reshape(v1, (1, total))

    cat_flat = _identity_copy(v1_flat)
    concatenated = jnp.reshape(cat_flat, (B, C, H, W))

    # PyTorch's split returns channel views of v1; values are identical to
    # slicing `concatenated` (which aliases v1's data via the identity copy).
    splits = tuple(concatenated[:, i : i + 1, :, :] for i in range(C))

    # torch.squeeze(v2): drop all size-1 dims — pure metadata, no kernel.
    squeezed_shape = tuple(d for d in v2.shape if d != 1)
    squeezed = jnp.reshape(v2, squeezed_shape)

    return concatenated, splits, squeezed


if __name__ == "__main__":
    key = jax.random.PRNGKey(0)
    k1, k2 = jax.random.split(key)
    # v1 must have exactly 3 channels on dim=1 for split([1,1,1], dim=1).
    v1 = jax.random.normal(k1, (2, 3, 16, 16), dtype=jnp.float32)
    # v2 has size-1 dims so squeeze does something: (2,1,16,1) -> (2,16).
    v2 = jax.random.normal(k2, (2, 1, 16, 1), dtype=jnp.float32)

    concatenated, splits, squeezed = model_forward(v1, v2)
    jax.block_until_ready(concatenated)
    jax.block_until_ready(splits)
    jax.block_until_ready(squeezed)

    # Sanity checks against the reference semantics.
    assert concatenated.shape == v1.shape
    assert bool(jnp.allclose(concatenated, v1))
    for i in range(3):
        assert splits[i].shape == (2, 1, 16, 16)
        assert bool(jnp.allclose(splits[i], v1[:, i : i + 1]))
    assert squeezed.shape == (2, 16)
    assert bool(jnp.allclose(squeezed, jnp.squeeze(v2)))

    print("KERNEL_OK")
</pallas_src>

<mosaic_0001>
module attributes {stable_mosaic.version = 11 : i64} {
  func.func @_identity_copy_kernel(%arg0: memref<12x128xf32, #tpu.memory_space<vmem>>, %arg1: memref<12x128xf32, #tpu.memory_space<vmem>>) attributes {dimension_semantics = [], scalar_prefetch = 0 : i64, scratch_operands = 0 : i64, tpu.core_type = #tpu.core_type<tc>} {
    %c0 = arith.constant 0 : index
    %c0_0 = arith.constant 0 : index
    %0 = vector.load %arg0[%c0, %c0_0] : memref<12x128xf32, #tpu.memory_space<vmem>>, vector<12x128xf32>
    %c0_1 = arith.constant 0 : index
    %c0_2 = arith.constant 0 : index
    %1 = vector.load %arg1[%c0_1, %c0_2] : memref<12x128xf32, #tpu.memory_space<vmem>>, vector<12x128xf32>
    tpu.vector_store %arg1[%c0_1, %c0_2], %0 {strides = array<i32>} : memref<12x128xf32, #tpu.memory_space<vmem>>, vector<12x128xf32>,
    return
  }
}

</mosaic_0001>

<llo_original>
// kernel: tpu_custom_call.1
$region0: #{tpu_custom_call.1}
  #allocation0 [shape = 'u32[]', space=smem, size = 0x4, offset = 0x4, fixed_abs, tag = 'smem constant byte address 0x4 - core index']
  #allocation1 [shape = 'u32[144,128]{1,0:T(1,128)}', space=vmem, size = 0x12000, scoped, tag = 'internal scratch']
  %s0 = inlined_call_operand.hbm [shape: f32[12,128], index: 0, kind: input, shape index: {}, may-alias: {0,1}]
  %s1 = inlined_call_operand.hbm [shape: f32[12,128], index: 1, kind: output, shape index: {}, may-alias: {0,1}]
  %s2 = sld [smem:[#allocation0]]
  $region18: #{tpu_custom_call.1} parent=0
    _
  %s4 = ssub.s32 1, %s2
  %s5 = scalar_select 0, %s4, %s2
  $region1: #{tpu_custom_call.1} parent=0
    #allocation2 [shape = 'u8[8192]{0}', space=vmem, size = 0x2000, scoped, tag = 'input window, operand 0, single buffered']
    #allocation3 [shape = 's32[1]{0}', space=sflag, size = 0x4, scoped, tag = 'scoped memory for tpu_custom_call.1']
    #allocation4 [shape = 's32[1]{0}', space=sflag, size = 0x4, scoped, tag = 'scoped memory for tpu_custom_call.1']
    #allocation5 [shape = 'u8[8192]{0}', space=vmem, size = 0x2000, scoped, tag = 'output window, operand 0, single buffered']
    %6 = vsyncpa [#allocation3], 0
    %7 = vsyncpa [#allocation4], 0
    // Predicated region
    $region2: #{tpu_custom_call.1} parent=1 // pred_check
      _
    $region3: #{tpu_custom_call.1} parent=1 // pred_check_branch
      %9 = sbr.rel (0) target = $region5
    $region4: #{tpu_custom_call.1} parent=1 // pred_region
      %s11 = ssub.s32 256, 256
      %12 = vsyncadd [#allocation3], %s11
      %s13 = sshll.u32 [#allocation2], 4
      %s14 = int_to_ptr.vmem [resolvable:$true] %s13
      %19 = dma.hbm_to_vmem [thread:$0]  %s0, 256, %s14, [#allocation3], 128, 128, 8
    $region5: #{tpu_custom_call.1} parent=1 // pred_fallthru
      _
    // Predicated region
    $region6: #{tpu_custom_call.1} parent=1 // pred_check
      _
    $region7: #{tpu_custom_call.1} parent=1 // pred_check_branch
      %21 = sbr.rel (0) target = $region9
    $region8: #{tpu_custom_call.1} parent=1 // pred_region
      %22 = dma.done [#allocation3], 256
    $region9: #{tpu_custom_call.1} parent=1 // pred_fallthru
      _
    %v23 = vld [vmem:[#allocation2] sm:$0xff]
    %v24 = vld [vmem:[#allocation2 + $0x8] sm:$0xf]
    %25 = vst [vmem:[#allocation5] sm:$0xff] %v23
    %26 = vst [vmem:[#allocation5 + $0x8] sm:$0xf] %v24
    // Predicated region
    $region10: #{tpu_custom_call.1} parent=1 // pred_check
      _
    $region11: #{tpu_custom_call.1} parent=1 // pred_check_branch
      %28 = sbr.rel (0) target = $region13
    $region12: #{tpu_custom_call.1} parent=1 // pred_region
      %s30 = ssub.s32 256, 256
      %31 = vsyncadd [#allocation4], %s30
      %s32 = sshll.u32 [#allocation5], 4
      %s33 = int_to_ptr.vmem [resolvable:$true] %s32
      %38 = dma.vmem_to_hbm [thread:$0]  %s33, 256, %s1, [#allocation4], 128, 128, 8
    $region13: #{tpu_custom_call.1} parent=1 // pred_fallthru
      _
    // Predicated region
    $region14: #{tpu_custom_call.1} parent=1 // pred_check
      _
    $region15: #{tpu_custom_call.1} parent=1 // pred_check_branch
      %40 = sbr.rel (0) target = $region17
    $region16: #{tpu_custom_call.1} parent=1 // pred_region
      %41 = dma.done [#allocation4], 256
    $region17: #{tpu_custom_call.1} parent=1 // pred_fallthru
      _
    %42 = vsyncpa [#allocation3], 1
    %43 = vsyncpa [#allocation4], 1

</llo_original>
